<compile_context>
chip_gen: v6e
topology: v6e:2x2x1
jax: 0.10.0
libtpu: 0.0.40
codegen_flags: <defaults>
</compile_context>

<pallas_src>
import jax
import jax.numpy as jnp
from jax.experimental import pallas as pl
from jax.experimental.pallas import tpu as pltpu


_IN, _HID, _OUT = 27, 8, 3       # fc0: 27 -> 8, fc1: 8 -> 3
_LANE = 128                      # TPU lane width
_SUBLANE = 8                     # f32 sublane multiple
_DEFAULT_TILE_B = 8192           # batch rows per grid step (multiple of 128)


def _round_up(n, m):
    return ((n + m - 1) // m) * m


def _choose_tile(batch, desired):
    """Pick the batch tile (the sublane axis of every streamed block)."""
    if batch <= 2 * _LANE:
        # Tiny batch: a single sublane-aligned block covering everything.
        return _round_up(batch, _SUBLANE)
    # Cap so the 1-D grid has >= 2 steps: with dimension_semantics=("parallel",)
    # both v7x TensorCores then get work (harmless on single-TC v5e/v6e).
    half = _round_up((batch + 1) // 2, _LANE)
    return min(desired, half)


def _mlp_kernel(x_ref, w0t_ref, b0_ref, w1t_ref, b1_ref, o_ref):
    # fc0: (tile, 27) @ (27, 8) + (1, 8), then ReLU.
    h = jnp.dot(x_ref[...], w0t_ref[...], preferred_element_type=jnp.float32)
    h = jnp.maximum(h + b0_ref[...], 0.0)                        # (tile, 8)
    # fc1: (tile, 8) @ (8, 3) + (1, 3).
    out = jnp.dot(h, w1t_ref[...], preferred_element_type=jnp.float32)
    o_ref[...] = (out + b1_ref[...]).astype(o_ref.dtype)         # (tile, 3)


def neural_net_forward(x, w0, b0, w1, b1, *, tile_b=_DEFAULT_TILE_B):
    """NeuralNet.forward: fc1(relu(fc0(x))).

    x : (B, 27) f32   (native PyTorch row-major batch layout, streamed as-is)
    w0: (8, 27), b0: (8,)   -- fc0, PyTorch (out_features, in_features) layout
    w1: (3, 8),  b1: (3,)   -- fc1
    returns (B, 3) f32
    """
    batch = x.shape[0]
    tile = _choose_tile(batch, tile_b)
    grid = (pl.cdiv(batch, tile),)

    # Tiny one-time parameter reshapes (<2 KB total; no extra pass over x).
    w0t = w0.T                    # (27, 8)
    w1t = w1.T                    # (8, 3)
    b0r = b0.reshape(1, _HID)
    b1r = b1.reshape(1, _OUT)

    return pl.pallas_call(
        _mlp_kernel,
        out_shape=jax.ShapeDtypeStruct((batch, _OUT), jnp.float32),
        grid=grid,
        in_specs=[
            # Streaming batch tiles in x's native layout (auto double-buffered).
            pl.BlockSpec((tile, _IN), lambda i: (i, 0)),
            # Parameters: constant index_map -> fetched once, VMEM-resident.
            pl.BlockSpec((_IN, _HID), lambda i: (0, 0)),
            pl.BlockSpec((1, _HID), lambda i: (0, 0)),
            pl.BlockSpec((_HID, _OUT), lambda i: (0, 0)),
            pl.BlockSpec((1, _OUT), lambda i: (0, 0)),
        ],
        # Write (tile, 3) blocks straight into the (B, 3) output.
        out_specs=pl.BlockSpec((tile, _OUT), lambda i: (i, 0)),
        compiler_params=pltpu.CompilerParams(
            dimension_semantics=("parallel",),   # shard batch tiles across TCs (v7x)
            # Natural-layout (tile, 27)/(tile, 3) blocks lane-pad 27/3 -> 128 in
            # VMEM; at tile=8192 the double-buffered blocks + intermediates are
            # ~24-28 MiB, above v5e's 16 MiB scoped default, so raise the limit.
            vmem_limit_bytes=48 * 1024 * 1024,
        ),
    )(x, w0t, b0r, w1t, b1r)


if __name__ == "__main__":
    key = jax.random.PRNGKey(0)
    kx, k0, k1, k2, k3 = jax.random.split(key, 5)

    batch = 8
    x = jax.random.normal(kx, (batch, _IN), jnp.float32)

    # PyTorch-native parameter shapes (out_features, in_features).
    # TODO(synk): fc2 = nn.Linear(16, 4) is defined in __init__ but never used
    # in forward(); it contributes nothing to the output and is omitted here.
    w0 = jax.random.normal(k0, (_HID, _IN), jnp.float32) * 0.1
    b0 = jax.random.normal(k1, (_HID,), jnp.float32) * 0.1
    w1 = jax.random.normal(k2, (_OUT, _HID), jnp.float32) * 0.1
    b1 = jax.random.normal(k3, (_OUT,), jnp.float32) * 0.1

    out = neural_net_forward(x, w0, b0, w1, b1)
    out = jax.block_until_ready(out)

    # Pure-JAX reference (semantics of the PyTorch forward).
    ref = jnp.maximum(x @ w0.T + b0, 0.0) @ w1.T + b1
    assert out.shape == (batch, _OUT)
    assert jnp.allclose(out, ref, atol=1e-5, rtol=1e-5)

    print("KERNEL_OK")
</pallas_src>

<mosaic_0001>
module attributes {stable_mosaic.version = 11 : i64} {
  func.func @_mlp_kernel(%arg0: i32, %arg1: memref<8x27xf32, #tpu.memory_space<vmem>>, %arg2: memref<27x8xf32, #tpu.memory_space<vmem>>, %arg3: memref<1x8xf32, #tpu.memory_space<vmem>>, %arg4: memref<8x3xf32, #tpu.memory_space<vmem>>, %arg5: memref<1x3xf32, #tpu.memory_space<vmem>>, %arg6: memref<8x3xf32, #tpu.memory_space<vmem>>) attributes {dimension_semantics = [#tpu.dimension_semantics<parallel>], iteration_bounds = array<i64: 1>, scalar_prefetch = 0 : i64, scratch_operands = 0 : i64, tpu.core_type = #tpu.core_type<tc>, window_params = [{transform_indices = @transform_0, window_bounds = array<i64: 8, 27>}, {pipeline_mode = #tpu.pipeline_mode<synchronous>, transform_indices = @transform_1, window_bounds = array<i64: 27, 8>}, {pipeline_mode = #tpu.pipeline_mode<synchronous>, transform_indices = @transform_2, window_bounds = array<i64: 1, 8>}, {pipeline_mode = #tpu.pipeline_mode<synchronous>, transform_indices = @transform_3, window_bounds = array<i64: 8, 3>}, {pipeline_mode = #tpu.pipeline_mode<synchronous>, transform_indices = @transform_4, window_bounds = array<i64: 1, 3>}, {transform_indices = @transform_5, window_bounds = array<i64: 8, 3>}]} {
    %c0 = arith.constant 0 : index
    %c0_0 = arith.constant 0 : index
    %0 = vector.load %arg1[%c0, %c0_0] : memref<8x27xf32, #tpu.memory_space<vmem>>, vector<8x27xf32>
    %c0_1 = arith.constant 0 : index
    %c0_2 = arith.constant 0 : index
    %1 = vector.load %arg2[%c0_1, %c0_2] : memref<27x8xf32, #tpu.memory_space<vmem>>, vector<27x8xf32>
    %cst = arith.constant dense<0.000000e+00> : vector<8x8xf32>
    %2 = tpu.matmul %0, %1, %cst {dimension_numbers = #tpu.dot_dimension_numbers<[1], [0], [0], [1], [0, 0, 1, 1], [], []>} : vector<8x27xf32>, vector<27x8xf32>, vector<8x8xf32> -> vector<8x8xf32>
    %c0_3 = arith.constant 0 : index
    %c0_4 = arith.constant 0 : index
    %3 = vector.load %arg3[%c0_3, %c0_4] : memref<1x8xf32, #tpu.memory_space<vmem>>, vector<1x8xf32>
    %4 = vector.broadcast %3 : vector<1x8xf32> to vector<8x8xf32>
    %5 = arith.addf %2, %4 : vector<8x8xf32>
    %cst_5 = arith.constant 0.000000e+00 : f32
    %6 = vector.broadcast %cst_5 : f32 to vector<8x8xf32>
    %7 = arith.maximumf %5, %6 : vector<8x8xf32>
    %c0_6 = arith.constant 0 : index
    %c0_7 = arith.constant 0 : index
    %8 = vector.load %arg4[%c0_6, %c0_7] : memref<8x3xf32, #tpu.memory_space<vmem>>, vector<8x3xf32>
    %cst_8 = arith.constant dense<0.000000e+00> : vector<8x3xf32>
    %9 = tpu.matmul %7, %8, %cst_8 {dimension_numbers = #tpu.dot_dimension_numbers<[1], [0], [0], [1], [0, 0, 1, 1], [], []>} : vector<8x8xf32>, vector<8x3xf32>, vector<8x3xf32> -> vector<8x3xf32>
    %c0_9 = arith.constant 0 : index
    %c0_10 = arith.constant 0 : index
    %10 = vector.load %arg5[%c0_9, %c0_10] : memref<1x3xf32, #tpu.memory_space<vmem>>, vector<1x3xf32>
    %11 = vector.broadcast %10 : vector<1x3xf32> to vector<8x3xf32>
    %12 = arith.addf %9, %11 : vector<8x3xf32>
    %c0_11 = arith.constant 0 : index
    %c0_12 = arith.constant 0 : index
    %13 = vector.load %arg6[%c0_11, %c0_12] : memref<8x3xf32, #tpu.memory_space<vmem>>, vector<8x3xf32>
    tpu.vector_store %arg6[%c0_11, %c0_12], %12 {strides = array<i32>} : memref<8x3xf32, #tpu.memory_space<vmem>>, vector<8x3xf32>,
    return
  }
  func.func @transform_0(%arg0: i32) -> (i32, i32) {
    %c0_i32 = arith.constant 0 : i32
    %c0_i32_0 = arith.constant 0 : i32
    return %arg0, %c0_i32 : i32, i32
  }
  func.func @transform_1(%arg0: i32) -> (i32, i32) {
    %c0_i32 = arith.constant 0 : i32
    %c0_i32_0 = arith.constant 0 : i32
    %c0_i32_1 = arith.constant 0 : i32
    return %c0_i32, %c0_i32_0 : i32, i32
  }
  func.func @transform_2(%arg0: i32) -> (i32, i32) {
    %c0_i32 = arith.constant 0 : i32
    %c0_i32_0 = arith.constant 0 : i32
    %c0_i32_1 = arith.constant 0 : i32
    return %c0_i32, %c0_i32_0 : i32, i32
  }
  func.func @transform_3(%arg0: i32) -> (i32, i32) {
    %c0_i32 = arith.constant 0 : i32
    %c0_i32_0 = arith.constant 0 : i32
    %c0_i32_1 = arith.constant 0 : i32
    return %c0_i32, %c0_i32_0 : i32, i32
  }
  func.func @transform_4(%arg0: i32) -> (i32, i32) {
    %c0_i32 = arith.constant 0 : i32
    %c0_i32_0 = arith.constant 0 : i32
    %c0_i32_1 = arith.constant 0 : i32
    return %c0_i32, %c0_i32_0 : i32, i32
  }
  func.func @transform_5(%arg0: i32) -> (i32, i32) {
    %c0_i32 = arith.constant 0 : i32
    %c0_i32_0 = arith.constant 0 : i32
    return %arg0, %c0_i32 : i32, i32
  }
}

</mosaic_0001>

<llo_original>
// kernel: tpu_custom_call.1
$region0: #{tpu_custom_call.1}
  #allocation0 [shape = 'u32[]', space=smem, size = 0x4, offset = 0x4, fixed_abs, tag = 'smem constant byte address 0x4 - core index']
  #allocation1 [shape = 'u32[144,128]{1,0:T(1,128)}', space=vmem, size = 0x12000, scoped, tag = 'internal scratch']
  %s0 = inlined_call_operand.vmem [shape: f32[8,27], index: 0, kind: input, shape index: {}]
  %s1 = inlined_call_operand.vmem [shape: f32[27,8], index: 1, kind: input, shape index: {}]
  %s2 = inlined_call_operand.vmem [shape: f32[1,8], index: 2, kind: input, shape index: {}]
  %s3 = inlined_call_operand.vmem [shape: f32[8,3], index: 3, kind: input, shape index: {}]
  %s4 = inlined_call_operand.vmem [shape: f32[1,3], index: 4, kind: input, shape index: {}]
  %s5 = inlined_call_operand.vmem [shape: f32[8,3], index: 5, kind: output, shape index: {}]
  %s6 = sld [smem:[#allocation0]]
  $region30: #{tpu_custom_call.1} parent=0
    _
  %s8 = ssub.s32 1, %s6
  %s9 = scalar_select 0, %s8, %s6
  // Predicated region
  $region2: #{tpu_custom_call.1} parent=0 // pred_check
    _
  $region3: #{tpu_custom_call.1} parent=0 // pred_check_branch
    %11 = sbr.rel (0) target = $region5
  $region4: #{tpu_custom_call.1} parent=0 // pred_region
    _
  $region5: #{tpu_custom_call.1} parent=0 // pred_fallthru
    _
  // Predicated region
  $region6: #{tpu_custom_call.1} parent=0 // pred_check
    _
  $region7: #{tpu_custom_call.1} parent=0 // pred_check_branch
    %13 = sbr.rel (0) target = $region9
  $region8: #{tpu_custom_call.1} parent=0 // pred_region
    _
  $region9: #{tpu_custom_call.1} parent=0 // pred_fallthru
    _
  // Predicated region
  $region10: #{tpu_custom_call.1} parent=0 // pred_check
    _
  $region11: #{tpu_custom_call.1} parent=0 // pred_check_branch
    %15 = sbr.rel (0) target = $region13
  $region12: #{tpu_custom_call.1} parent=0 // pred_region
    _
  $region13: #{tpu_custom_call.1} parent=0 // pred_fallthru
    _
  // Predicated region
  $region14: #{tpu_custom_call.1} parent=0 // pred_check
    _
  $region15: #{tpu_custom_call.1} parent=0 // pred_check_branch
    %17 = sbr.rel (0) target = $region17
  $region16: #{tpu_custom_call.1} parent=0 // pred_region
    _
  $region17: #{tpu_custom_call.1} parent=0 // pred_fallthru
    _
  // Predicated region
  $region18: #{tpu_custom_call.1} parent=0 // pred_check
    _
  $region19: #{tpu_custom_call.1} parent=0 // pred_check_branch
    %19 = sbr.rel (0) target = $region21
  $region20: #{tpu_custom_call.1} parent=0 // pred_region
    _
  $region21: #{tpu_custom_call.1} parent=0 // pred_fallthru
    _
  %v20 = vld [vmem:[%s0] sm:$0xff]
  %v21 = vld [vmem:[%s1] sm:$0xff]
  %v22 = vld [vmem:[%s1 + $0x8] sm:$0xff]
  %v23 = vld [vmem:[%s1 + $0x10] sm:$0xff]
  %v24 = vld [vmem:[%s1 + $0x18] sm:$0x7]
  %v25 = vld [vmem:[%s2] sm:$0x1]
  %v27 = vlaneseq
  %v28 = vshrl.u32 %v27, 7
  %v29 = vsub.s32 0, %v28
  %v30 = vrot.slane %v25, %v29
  %vm32 = vcmask 220160
  %v34 = vsel %vm32, %v20, 0
  %vm36 = vcmask 1042432
  %v38 = vsel %vm36, %v24, 0
  %40 = vmatprep.subr.mxu0 0.0
  %41 = vmatpush1.msra.mxu0 0.0
  %42 = vmatprep.subr.mxu0 0.0
  %43 = vmatpush1.msra.mxu0 0.0
  %44 = vmatprep.subr.mxu0 0.0
  %45 = vmatpush1.msra.mxu0 0.0
  %46 = vmatprep.subr.mxu0 0.0
  %47 = vmatpush1.msra.mxu0 0.0
  %48 = vmatprep.subr.mxu0 0.0
  %49 = vmatpush1.msra.mxu0 0.0
  %50 = vmatprep.subr.mxu0 0.0
  %51 = vmatpush1.msra.mxu0 0.0
  %52 = vmatprep.subr.mxu0 0.0
  %53 = vmatpush1.msra.mxu0 0.0
  %54 = vmatprep.subr.mxu0 0.0
  %55 = vmatpush1.msra.mxu0 0.0
  %56 = vmatprep.subr.mxu0 0.0
  %57 = vmatpush1.msra.mxu0 0.0
  %58 = vmatprep.subr.mxu0 0.0
  %59 = vmatpush1.msra.mxu0 0.0
  %60 = vmatprep.subr.mxu0 0.0
  %61 = vmatpush1.msra.mxu0 0.0
  %62 = vmatprep.subr.mxu0 0.0
  %63 = vmatpush1.msra.mxu0 0.0
  %64 = vmatprep.subr.mxu0 0.0
  %65 = vmatpush1.msra.mxu0 %v38
  %66 = vmatprep.subr.mxu0 0.0
  %67 = vmatpush1.msra.mxu0 %v23
  %68 = vmatprep.subr.mxu0 0.0
  %69 = vmatpush1.msra.mxu0 %v22
  %70 = vmatprep.subr.mxu0 0.0
  %71 = vmatpush1.msra.mxu0 %v21
  %72 = vmatprep.subr.mxu0 0.0
  %73 = vmatpush2.msra.mxu0 0.0
  %74 = vmatprep.subr.mxu0 0.0
  %75 = vmatpush2.msra.mxu0 0.0
  %76 = vmatprep.subr.mxu0 0.0
  %77 = vmatpush2.msra.mxu0 0.0
  %78 = vmatprep.subr.mxu0 0.0
  %79 = vmatpush2.msra.mxu0 0.0
  %80 = vmatprep.subr.mxu0 0.0
  %81 = vmatpush2.msra.mxu0 0.0
  %82 = vmatprep.subr.mxu0 0.0
  %83 = vmatpush2.msra.mxu0 0.0
  %84 = vmatprep.subr.mxu0 0.0
  %85 = vmatpush2.msra.mxu0 0.0
  %86 = vmatprep.subr.mxu0 0.0
  %87 = vmatpush2.msra.mxu0 0.0
  %88 = vmatprep.subr.mxu0 0.0
  %89 = vmatpush2.msra.mxu0 0.0
  %90 = vmatprep.subr.mxu0 0.0
  %91 = vmatpush2.msra.mxu0 0.0
  %92 = vmatprep.subr.mxu0 0.0
  %93 = vmatpush2.msra.mxu0 0.0
  %94 = vmatprep.subr.mxu0 0.0
  %95 = vmatpush2.msra.mxu0 0.0
  %96 = vmatprep.subr.mxu0 0.0
  %97 = vmatpush2.msra.mxu0 0.0
  %98 = vmatprep.subr.mxu0 0.0
  %99 = vmatpush2.msra.mxu0 0.0
  %100 = vmatprep.subr.mxu0 0.0
  %101 = vmatpush2.msra.mxu0 0.0
  %102 = vmatprep.subr.mxu0 0.0
  %103 = vmatpush2.msra.mxu0 0.0
  %104 = vmatprep.mubr.f32.mxu0 0.0
  %105 = vmatmul.mubr.f32.gmra.mxu0 %v34
  %v106 = vpop.f32.mrf.mxu0
  %v107 = vadd.f32 %v30, %v106
  %v108 = vpop.f32.mrf.mxu0
  %109 = vdwg.mxu0
  %v110 = vmax.f32 %v107, 0.0
  %v111 = vld [vmem:[%s3] sm:$0xff]
  %v112 = vld [vmem:[%s4] sm:$0x1]
  %v114 = vlaneseq
  %v115 = vshrl.u32 %v114, 7
  %v116 = vsub.s32 0, %v115
  %v117 = vrot.slane %v112, %v116
  %vm119 = vcmask 64512
  %v121 = vsel %vm119, %v110, 0
  %123 = vmatprep.subr.mxu0 0.0
  %124 = vmatpush1.msra.mxu0 0.0
  %125 = vmatprep.subr.mxu0 0.0
  %126 = vmatpush1.msra.mxu0 0.0
  %127 = vmatprep.subr.mxu0 0.0
  %128 = vmatpush1.msra.mxu0 0.0
  %129 = vmatprep.subr.mxu0 0.0
  %130 = vmatpush1.msra.mxu0 0.0
  %131 = vmatprep.subr.mxu0 0.0
  %132 = vmatpush1.msra.mxu0 0.0
  %133 = vmatprep.subr.mxu0 0.0
  %134 = vmatpush1.msra.mxu0 0.0
  %135 = vmatprep.subr.mxu0 0.0
  %136 = vmatpush1.msra.mxu0 0.0
  %137 = vmatprep.subr.mxu0 0.0
  %138 = vmatpush1.msra.mxu0 0.0
  %139 = vmatprep.subr.mxu0 0.0
  %140 = vmatpush1.msra.mxu0 0.0
  %141 = vmatprep.subr.mxu0 0.0
  %142 = vmatpush1.msra.mxu0 0.0
  %143 = vmatprep.subr.mxu0 0.0
  %144 = vmatpush1.msra.mxu0 0.0
  %145 = vmatprep.subr.mxu0 0.0
  %146 = vmatpush1.msra.mxu0 0.0
  %147 = vmatprep.subr.mxu0 0.0
  %148 = vmatpush1.msra.mxu0 0.0
  %149 = vmatprep.subr.mxu0 0.0
  %150 = vmatpush1.msra.mxu0 0.0
  %151 = vmatprep.subr.mxu0 0.0
  %152 = vmatpush1.msra.mxu0 0.0
  %153 = vmatprep.subr.mxu0 0.0
  %154 = vmatpush1.msra.mxu0 %v111
  %155 = vmatprep.subr.mxu0 0.0
  %156 = vmatpush2.msra.mxu0 0.0
  %157 = vmatprep.subr.mxu0 0.0
  %158 = vmatpush2.msra.mxu0 0.0
  %159 = vmatprep.subr.mxu0 0.0
  %160 = vmatpush2.msra.mxu0 0.0
  %161 = vmatprep.subr.mxu0 0.0
  %162 = vmatpush2.msra.mxu0 0.0
  %163 = vmatprep.subr.mxu0 0.0
  %164 = vmatpush2.msra.mxu0 0.0
  %165 = vmatprep.subr.mxu0 0.0
  %166 = vmatpush2.msra.mxu0 0.0
  %167 = vmatprep.subr.mxu0 0.0
  %168 = vmatpush2.msra.mxu0 0.0
  %169 = vmatprep.subr.mxu0 0.0
  %170 = vmatpush2.msra.mxu0 0.0
  %171 = vmatprep.subr.mxu0 0.0
  %172 = vmatpush2.msra.mxu0 0.0
  %173 = vmatprep.subr.mxu0 0.0
  %174 = vmatpush2.msra.mxu0 0.0
  %175 = vmatprep.subr.mxu0 0.0
  %176 = vmatpush2.msra.mxu0 0.0
  %177 = vmatprep.subr.mxu0 0.0
  %178 = vmatpush2.msra.mxu0 0.0
  %179 = vmatprep.subr.mxu0 0.0
  %180 = vmatpush2.msra.mxu0 0.0
  %181 = vmatprep.subr.mxu0 0.0
  %182 = vmatpush2.msra.mxu0 0.0
  %183 = vmatprep.subr.mxu0 0.0
  %184 = vmatpush2.msra.mxu0 0.0
  %185 = vmatprep.subr.mxu0 0.0
  %186 = vmatpush2.msra.mxu0 0.0
  %187 = vmatprep.mubr.f32.mxu0 0.0
  %188 = vmatmul.mubr.f32.gmra.mxu0 %v121
  %v189 = vpop.f32.mrf.mxu0
  %v190 = vadd.f32 %v117, %v189
  %v191 = vpop.f32.mrf.mxu0
  %192 = vdwg.mxu0
  %vm193 = vcmask 23552
  %194 = vst.msk [vmem:[%s5] sm:$0xff] %vm193, %v190
  // Predicated region
  $region22: #{tpu_custom_call.1} parent=0 // pred_check
    _
  $region23: #{tpu_custom_call.1} parent=0 // pred_check_branch
    %196 = sbr.rel (0) target = $region25
  $region24: #{tpu_custom_call.1} parent=0 // pred_region
    _
  $region25: #{tpu_custom_call.1} parent=0 // pred_fallthru
    _
  // Predicated region
  $region26: #{tpu_custom_call.1} parent=0 // pred_check
    _
  $region27: #{tpu_custom_call.1} parent=0 // pred_check_branch
    %198 = sbr.rel (0) target = $region29
  $region28: #{tpu_custom_call.1} parent=0 // pred_region
    _
  $region29: #{tpu_custom_call.1} parent=0 // pred_fallthru
    _

</llo_original>
